<compile_context>
chip_gen: v7x
topology: tpu7x:2x2x1
jax: 0.10.0
libtpu: 0.0.40
codegen_flags: <defaults>
</compile_context>

<pallas_src>
import jax
import jax.numpy as jnp
from jax import lax
from jax.experimental import pallas as pl
from jax.experimental.pallas import tpu as pltpu


def _attention_kernel(q_ref, k_ref, v_ref, o_ref):
    # q_ref: (1, 1, tq, d) bf16 scaled query tile
    # k_ref: (1, 1, n,  d) bf16 keys with positional embedding folded in
    # v_ref: (1, 1, n,  d) bf16 values
    # o_ref: (1, 1, tq, d) bf16 output tile
    q = q_ref[0, 0]                                               # (tq, d)
    k = k_ref[0, 0]                                               # (n, d)
    v = v_ref[0, 0]                                               # (n, d)

    # Contract dim 1 of both operands -> no in-kernel transpose of k.
    sim = lax.dot_general(q, k, (((1,), (1,)), ((), ())),
                          preferred_element_type=jnp.float32)     # (tq, n) f32

    sim = sim - jnp.max(sim, axis=-1, keepdims=True)
    # bf16 numerator: halves the (tq, n) slab traffic; row-sum accumulated in f32.
    p = jnp.exp(sim.astype(jnp.bfloat16))                         # (tq, n) bf16
    l = jnp.sum(p, axis=-1, keepdims=True, dtype=jnp.float32)     # (tq, 1) f32

    out = jnp.dot(p, v, preferred_element_type=jnp.float32)       # (tq, d) f32
    # Deferred normalisation (post attn@v): scales only (tq, d), not (tq, n).
    out = out * pl.reciprocal(l, approx=True)
    o_ref[0, 0] = out.astype(o_ref.dtype)


def _choose_q_tile(n, q_block):
    """Largest tile <= q_block that divides n and is a multiple of 8 (or full n)."""
    if n <= q_block:
        return n
    tq = (q_block // 8) * 8
    while tq >= 8:
        if n % tq == 0:
            return tq
        tq -= 8
    return n


def _vmem_cap_bytes():
    """~7/8 of physical VMEM: ~56 MiB on v7x, ~112 MiB on v5e/v6e."""
    phys = 64 * 1024 * 1024  # conservative default (v7x)
    try:
        info = pltpu.get_tpu_info()
        phys = int(getattr(info, "vmem_capacity_bytes", phys))
    except Exception:
        pass
    return (phys // 8) * 7


def _vmem_limit_bytes(n, d, tq):
    """VMEM budget from the actual (double-buffered) block sizes, with headroom."""
    def rup(x, m):
        return ((x + m - 1) // m) * m
    lane = 128
    q_blk = rup(tq, 16) * rup(d, lane) * 2        # bf16
    kv_blk = rup(n, 16) * rup(d, lane) * 2        # bf16
    o_blk = rup(tq, 16) * rup(d, lane) * 2        # bf16
    pipelined = 2 * (q_blk + 2 * kv_blk + o_blk)  # double-buffered blocks
    # Per-step temporaries: (tq, n) f32 logits, bf16 numerator, convert headroom.
    temps = (rup(tq, 8) * rup(n, lane) * 4
             + rup(tq, 16) * rup(n, lane) * 2
             + rup(tq, 8) * rup(n, lane) * 4)
    est = int((pipelined + temps) * 1.4)
    return min(max(est, 32 * 1024 * 1024), _vmem_cap_bytes())


def botnet_attention(fmap, qkv_weight, emb_height, emb_width, *,
                     heads, dim_head, q_block=256, out_dtype=jnp.float32):
    """fmap: (b, c, h, w) float32 (NCHW, PyTorch convention).
    qkv_weight: (3*heads*dim_head, c) — squeezed 1x1 conv weight.
    emb_height, emb_width: (fmap_size, dim_head) AbsPosEmb parameters.
    Returns: (b, heads*dim_head, h, w), matching the PyTorch Attention module.
    """
    b, c, h, w = fmap.shape
    n = h * w
    d = dim_head
    scale = d ** (-0.5)

    # Channels-last token layout, bf16 MXU operands.
    x = jnp.transpose(fmap, (0, 2, 3, 1)).reshape(b, n, c).astype(jnp.bfloat16)

    # Conv weight -> (heads, c, 3*d) with columns [q | k | v]; fold attention scale
    # into the q columns (exact: scale is a constant).
    wqkv = qkv_weight.reshape(3, heads, d, c)                     # [which, head, di, c]
    wqkv = jnp.transpose(wqkv, (1, 3, 0, 2)).reshape(heads, c, 3 * d)
    col_scale = jnp.concatenate([jnp.full((d,), scale, jnp.float32),
                                 jnp.ones((2 * d,), jnp.float32)])
    wqkv = (wqkv * col_scale).astype(jnp.bfloat16)

    # AbsPosEmb: emb[(i,j), :] = height[i] + width[j], flattened to (n, d).
    emb = (emb_height[:, None, :] + emb_width[None, :, :]).reshape(n, d).astype(jnp.float32)

    # Hoisted QKV projection: one wide bf16 MXU matmul with f32 accumulation.
    qkv = jnp.einsum('bnc,hcf->bhnf', x, wqkv,
                     preferred_element_type=jnp.float32)          # (b, H, n, 3d)
    q = qkv[..., :d].astype(jnp.bfloat16)                         # scale pre-folded
    # Fold positional logits into k:  q@k.T + q@emb.T == q@(k+emb).T
    k = (qkv[..., d:2 * d] + emb[None, None]).astype(jnp.bfloat16)
    v = qkv[..., 2 * d:].astype(jnp.bfloat16)

    tq = _choose_q_tile(n, q_block)
    grid = (b, heads, n // tq)

    flops = 4 * b * heads * n * n * d                 # QK^T + attn@V
    transcendentals = b * heads * n * n               # exp
    bytes_accessed = 4 * b * heads * n * d * 2        # q,k,v reads + out write (bf16)

    out_bhnd = pl.pallas_call(
        _attention_kernel,
        out_shape=jax.ShapeDtypeStruct((b, heads, n, d), jnp.bfloat16),
        grid_spec=pltpu.PrefetchScalarGridSpec(
            num_scalar_prefetch=0,
            grid=grid,
            in_specs=[
                # q tile streams along the innermost (query-tile) axis.
                pl.BlockSpec((1, 1, tq, d), lambda bi, hi, qi: (bi, hi, qi, 0)),
                # k / v: block index constant along qi -> DMA'd once per (batch, head).
                pl.BlockSpec((1, 1, n, d), lambda bi, hi, qi: (bi, hi, 0, 0)),
                pl.BlockSpec((1, 1, n, d), lambda bi, hi, qi: (bi, hi, 0, 0)),
            ],
            out_specs=pl.BlockSpec((1, 1, tq, d), lambda bi, hi, qi: (bi, hi, qi, 0)),
        ),
        compiler_params=pltpu.CompilerParams(
            dimension_semantics=("parallel", "parallel", "parallel"),
            vmem_limit_bytes=_vmem_limit_bytes(n, d, tq),
        ),
        cost_estimate=pl.CostEstimate(flops=flops,
                                      transcendentals=transcendentals,
                                      bytes_accessed=bytes_accessed),
    )(q, k, v)

    # 'b h (x y) d -> b (h d) x y'
    out = out_bhnd.reshape(b, heads, h, w, d)
    out = jnp.transpose(out, (0, 1, 4, 2, 3)).reshape(b, heads * d, h, w)
    return out.astype(out_dtype)


def _reference(fmap, qkv_weight, emb_height, emb_width, *, heads, dim_head):
    """Pure-JAX reference mirroring the PyTorch forward (with the same bf16 rounding
    points as the kernel, so only accumulation order / approx-reciprocal differ)."""
    b, c, h, w = fmap.shape
    n = h * w
    d = dim_head
    scale = d ** (-0.5)

    x = jnp.transpose(fmap, (0, 2, 3, 1)).reshape(b, n, c)
    x = x.astype(jnp.bfloat16).astype(jnp.float32)

    wqkv = qkv_weight.reshape(3, heads, d, c)
    wqkv = jnp.transpose(wqkv, (1, 3, 0, 2)).reshape(heads, c, 3 * d)
    col_scale = jnp.concatenate([jnp.full((d,), scale, jnp.float32),
                                 jnp.ones((2 * d,), jnp.float32)])
    wqkv = (wqkv * col_scale).astype(jnp.bfloat16).astype(jnp.float32)

    emb = (emb_height[:, None, :] + emb_width[None, :, :]).reshape(n, d)

    qkv = jnp.einsum('bnc,hcf->bhnf', x, wqkv)                    # (b, H, n, 3d)
    q = qkv[..., :d].astype(jnp.bfloat16).astype(jnp.float32)
    k = (qkv[..., d:2 * d] + emb[None, None]).astype(jnp.bfloat16).astype(jnp.float32)
    v = qkv[..., 2 * d:].astype(jnp.bfloat16).astype(jnp.float32)

    sim = jnp.einsum('bhid,bhjd->bhij', q, k)
    sim = sim - jnp.max(sim, axis=-1, keepdims=True)
    p = jnp.exp(sim.astype(jnp.bfloat16).astype(jnp.float32))
    l = jnp.sum(p, axis=-1, keepdims=True)
    out = jnp.einsum('bhij,bhjd->bhid',
                     p.astype(jnp.bfloat16).astype(jnp.float32), v) / l
    out = out.astype(jnp.bfloat16).astype(jnp.float32)
    out = out.reshape(b, heads, h, w, d)
    return jnp.transpose(out, (0, 1, 4, 2, 3)).reshape(b, heads * d, h, w)


if __name__ == "__main__":
    # Small shapes consistent with the module's Attention forward.
    B, C, FMAP = 2, 8, 8          # batch, in-channels ('dim'), spatial (h = w = fmap_size)
    HEADS, DIM_HEAD = 2, 16

    key = jax.random.PRNGKey(0)
    k_x, k_w, k_h, k_wd = jax.random.split(key, 4)

    fmap = jax.random.normal(k_x, (B, C, FMAP, FMAP), dtype=jnp.float32)
    # nn.Conv2d(dim, 3*heads*dim_head, 1, bias=False) weight, 1x1 squeezed.
    qkv_weight = jax.random.normal(
        k_w, (3 * HEADS * DIM_HEAD, C), dtype=jnp.float32) * (C ** -0.5)
    pos_scale = DIM_HEAD ** (-0.5)
    emb_height = jax.random.normal(k_h, (FMAP, DIM_HEAD), dtype=jnp.float32) * pos_scale
    emb_width = jax.random.normal(k_wd, (FMAP, DIM_HEAD), dtype=jnp.float32) * pos_scale

    ref = _reference(fmap, qkv_weight, emb_height, emb_width,
                     heads=HEADS, dim_head=DIM_HEAD)

    # 1) Single-tile path (tq == n).
    out = botnet_attention(fmap, qkv_weight, emb_height, emb_width,
                           heads=HEADS, dim_head=DIM_HEAD)
    out = jax.block_until_ready(out)
    assert out.shape == (B, HEADS * DIM_HEAD, FMAP, FMAP)
    assert jnp.allclose(out, ref, atol=5e-2, rtol=5e-2)

    # 2) Query-tiled path (exercises the constant k/v index map along the qi axis).
    out_tiled = botnet_attention(fmap, qkv_weight, emb_height, emb_width,
                                 heads=HEADS, dim_head=DIM_HEAD, q_block=16)
    out_tiled = jax.block_until_ready(out_tiled)
    assert jnp.allclose(out_tiled, ref, atol=5e-2, rtol=5e-2)

    print("KERNEL_OK")
</pallas_src>

<mosaic_0001>
module attributes {stable_mosaic.version = 11 : i64} {
  func.func @_attention_kernel(%arg0: i32, %arg1: i32, %arg2: i32, %arg3: memref<1x1x64x16xbf16, #tpu.memory_space<vmem>>, %arg4: memref<1x1x64x16xbf16, #tpu.memory_space<vmem>>, %arg5: memref<1x1x64x16xbf16, #tpu.memory_space<vmem>>, %arg6: memref<1x1x64x16xbf16, #tpu.memory_space<vmem>>) attributes {dimension_semantics = [#tpu.dimension_semantics<parallel>, #tpu.dimension_semantics<parallel>, #tpu.dimension_semantics<parallel>], iteration_bounds = array<i64: 2, 2, 1>, scalar_prefetch = 0 : i64, scratch_operands = 0 : i64, tpu.core_type = #tpu.core_type<tc>, window_params = [{transform_indices = @transform_0, window_bounds = array<i64: 1, 1, 64, 16>}, {transform_indices = @transform_1, window_bounds = array<i64: 1, 1, 64, 16>}, {transform_indices = @transform_2, window_bounds = array<i64: 1, 1, 64, 16>}, {transform_indices = @transform_3, window_bounds = array<i64: 1, 1, 64, 16>}]} {
    %c0 = arith.constant 0 : index
    %c0_0 = arith.constant 0 : index
    %c0_1 = arith.constant 0 : index
    %c0_2 = arith.constant 0 : index
    %0 = vector.load %arg3[%c0, %c0_0, %c0_1, %c0_2] : memref<1x1x64x16xbf16, #tpu.memory_space<vmem>>, vector<1x1x64x16xbf16>
    %1 = vector.shape_cast %0 : vector<1x1x64x16xbf16> to vector<64x16xbf16>
    %c0_3 = arith.constant 0 : index
    %c0_4 = arith.constant 0 : index
    %c0_5 = arith.constant 0 : index
    %c0_6 = arith.constant 0 : index
    %2 = vector.load %arg4[%c0_3, %c0_4, %c0_5, %c0_6] : memref<1x1x64x16xbf16, #tpu.memory_space<vmem>>, vector<1x1x64x16xbf16>
    %3 = vector.shape_cast %2 : vector<1x1x64x16xbf16> to vector<64x16xbf16>
    %c0_7 = arith.constant 0 : index
    %c0_8 = arith.constant 0 : index
    %c0_9 = arith.constant 0 : index
    %c0_10 = arith.constant 0 : index
    %4 = vector.load %arg5[%c0_7, %c0_8, %c0_9, %c0_10] : memref<1x1x64x16xbf16, #tpu.memory_space<vmem>>, vector<1x1x64x16xbf16>
    %5 = vector.shape_cast %4 : vector<1x1x64x16xbf16> to vector<64x16xbf16>
    %cst = arith.constant dense<0.000000e+00> : vector<64x64xf32>
    %6 = tpu.matmul %1, %3, %cst {dimension_numbers = #tpu.dot_dimension_numbers<[1], [1], [0], [0], [0, 0, 1, 0], [], []>} : vector<64x16xbf16>, vector<64x16xbf16>, vector<64x64xf32> -> vector<64x64xf32>
    %cst_11 = arith.constant dense<0xFF800000> : vector<64xf32>
    %7 = vector.multi_reduction <maximumf>, %6, %cst_11 [1] : vector<64x64xf32> to vector<64xf32>
    %8 = vector.shape_cast %7 : vector<64xf32> to vector<64x1xf32>
    %9 = vector.broadcast %8 : vector<64x1xf32> to vector<64x64xf32>
    %10 = arith.subf %6, %9 : vector<64x64xf32>
    %11 = arith.truncf %10 : vector<64x64xf32> to vector<64x64xbf16>
    %12 = math.exp %11 : vector<64x64xbf16>
    %13 = arith.extf %12 : vector<64x64xbf16> to vector<64x64xf32>
    %cst_12 = arith.constant dense<0.000000e+00> : vector<64xf32>
    %14 = vector.multi_reduction <add>, %13, %cst_12 [1] : vector<64x64xf32> to vector<64xf32>
    %15 = vector.shape_cast %14 : vector<64xf32> to vector<64x1xf32>
    %cst_13 = arith.constant dense<0.000000e+00> : vector<64x16xf32>
    %16 = tpu.matmul %12, %5, %cst_13 {dimension_numbers = #tpu.dot_dimension_numbers<[1], [0], [0], [1], [0, 0, 1, 1], [], []>} : vector<64x64xbf16>, vector<64x16xbf16>, vector<64x16xf32> -> vector<64x16xf32>
    %17 = tpu.reciprocal %15 {approx = true} : vector<64x1xf32> -> vector<64x1xf32>
    %18 = vector.broadcast %17 : vector<64x1xf32> to vector<64x16xf32>
    %19 = arith.mulf %16, %18 : vector<64x16xf32>
    %20 = arith.truncf %19 : vector<64x16xf32> to vector<64x16xbf16>
    %c0_14 = arith.constant 0 : index
    %c0_15 = arith.constant 0 : index
    %c0_16 = arith.constant 0 : index
    %c0_17 = arith.constant 0 : index
    %21 = vector.load %arg6[%c0_14, %c0_15, %c0_16, %c0_17] : memref<1x1x64x16xbf16, #tpu.memory_space<vmem>>, vector<1x1x64x16xbf16>
    %22 = vector.shape_cast %21 : vector<1x1x64x16xbf16> to vector<64x16xbf16>
    %23 = vector.shape_cast %20 : vector<64x16xbf16> to vector<1x1x64x16xbf16>
    tpu.vector_store %arg6[%c0_14, %c0_15, %c0_16, %c0_17], %23 {strides = array<i32>} : memref<1x1x64x16xbf16, #tpu.memory_space<vmem>>, vector<1x1x64x16xbf16>,
    return
  }
  func.func @transform_0(%arg0: i32, %arg1: i32, %arg2: i32) -> (i32, i32, i32, i32) {
    %c0_i32 = arith.constant 0 : i32
    %c0_i32_0 = arith.constant 0 : i32
    return %arg0, %arg1, %arg2, %c0_i32 : i32, i32, i32, i32
  }
  func.func @transform_1(%arg0: i32, %arg1: i32, %arg2: i32) -> (i32, i32, i32, i32) {
    %c0_i32 = arith.constant 0 : i32
    %c0_i32_0 = arith.constant 0 : i32
    %c0_i32_1 = arith.constant 0 : i32
    return %arg0, %arg1, %c0_i32, %c0_i32_0 : i32, i32, i32, i32
  }
  func.func @transform_2(%arg0: i32, %arg1: i32, %arg2: i32) -> (i32, i32, i32, i32) {
    %c0_i32 = arith.constant 0 : i32
    %c0_i32_0 = arith.constant 0 : i32
    %c0_i32_1 = arith.constant 0 : i32
    return %arg0, %arg1, %c0_i32, %c0_i32_0 : i32, i32, i32, i32
  }
  func.func @transform_3(%arg0: i32, %arg1: i32, %arg2: i32) -> (i32, i32, i32, i32) {
    %c0_i32 = arith.constant 0 : i32
    %c0_i32_0 = arith.constant 0 : i32
    return %arg0, %arg1, %arg2, %c0_i32 : i32, i32, i32, i32
  }
}

</mosaic_0001>

<llo_original>
// kernel: tpu_custom_call.1
$region0: #{tpu_custom_call.1}
  #allocation0 [shape = 'u32[]', space=smem, size = 0x4, offset = 0x4, fixed_abs, tag = 'smem constant byte address 0x4 - core index']
  #allocation1 [shape = 'u32[144,128]{1,0:T(1,128)}', space=vmem, size = 0x12000, scoped, tag = 'internal scratch']
  %s0 = inlined_call_operand.vmem [shape: bf16[2,2,64,16], index: 0, kind: input, shape index: {}]
  %s1 = inlined_call_operand.vmem [shape: bf16[2,2,64,16], index: 1, kind: input, shape index: {}]
  %s2 = inlined_call_operand.vmem [shape: bf16[2,2,64,16], index: 2, kind: input, shape index: {}]
  %s3 = inlined_call_operand.vmem [shape: bf16[2,2,64,16], index: 3, kind: output, shape index: {}]
  %s4 = sld [smem:[#allocation0]]
  $region45: #{tpu_custom_call.1} parent=0
    _
  %s6 = ssub.s32 1, %s4
  %s7 = scalar_select 0, %s6, %s4
  loop: start=0, step=1, limit=6
  $region2: #{tpu_custom_call.1} parent=0 // loop_pre_header
    _
  $region3: #{tpu_custom_call.1} parent=0 // loop_header
    %s9 = sphi 0, %s13
    %p10 = scmp.ge.s32.totalorder %s9, 6
    %s16 = sphi 0, %s35
    %s17 = sphi 0, %s31
    %s18 = sphi 0, %s27
    %s19 = sphi 0, %s16
    %s20 = sphi 0, %s17
    %s21 = sphi 0, %s18
    %s22 = sphi 0, %s19
    %s23 = sphi 0, %s20
    %s24 = sphi 0, %s21
    %s42 = sphi 0, %s44
    %s45 = sphi 0, %s42
    %s46 = sphi 0, %s45
    %s62 = sphi 0, %s46
    %s70 = sphi 0, %s72
    %s73 = sphi 0, %s70
    %s74 = sphi 0, %s73
    %s90 = sphi 0, %s74
    %s98 = sphi 0, %s100
    %s101 = sphi 0, %s98
    %s102 = sphi 0, %s101
    %s118 = sphi 0, %s102
    %s128 = sphi 0, %s130
    %s131 = sphi 0, %s128
    %s132 = sphi 0, %s131
    %s148 = sphi 0, %s132
  $region4: #{tpu_custom_call.1} parent=0 // loop_header_branch
    %12 = sbr.rel (%p10) target = $region8
  $region5: #{tpu_custom_call.1} parent=0 // loop_body
    %s14 = ssub.s32 %s9, 1
    %s15 = ssub.s32 %s9, 2
    %s25 = sadd.s32 1, %s18
    %p26 = scmp.ge.s32.totalorder %s25, 1
    %s27 = scalar_select %p26, 0, %s25
    %s28 = sadd.s32 1, %s17
    %s29 = scalar_select %p26, %s28, %s17
    %p30 = scmp.ge.s32.totalorder %s29, 2
    %s31 = scalar_select %p30, 0, %s29
    %s32 = sadd.s32 1, %s16
    %s33 = scalar_select %p30, %s32, %s16
    %p34 = scmp.ge.s32.totalorder %s33, 2
    %s35 = scalar_select %p34, 0, %s33
    %s36 = ssub.s32 %s16, %s35
    %s37 = ssub.s32 %s17, %s31
    %s38 = sor.u32 %s36, %s37
    %s39 = ssub.s32 %s18, %s27
    %s40 = sor.u32 %s38, %s39
    %p41 = scmp.eq.s32.totalorder %s40, 0
    %s43 = sadd.s32 %s42, 1
    %s44 = scalar_select %p41, %s42, %s43
    %p47 = pneg %p41
    %p48 = scmp.eq.s32.totalorder %s9, 3
    %p49 = por %p47, %p48
    %p50 = scmp.ne.s32.totalorder %s42, %s45
    %p51 = scmp.eq.s32.totalorder %s9, 0
    %p52 = por %p50, %p51
    %p53 = scmp.ne.s32.totalorder %s42, %s45
    %p54 = scmp.eq.s32.totalorder %s14, 3
    %p55 = por %p53, %p54
    %p56 = scmp.ne.s32.totalorder %s45, %s46
    %p57 = scmp.eq.s32.totalorder %s14, 0
    %p58 = por %p56, %p57
    %p59 = scmp.ne.s32.totalorder %s45, %s46
    %p60 = scmp.eq.s32.totalorder %s15, 3
    %p61 = por %p59, %p60
    %p63 = scmp.ne.s32.totalorder %s46, %s62
    %p64 = scmp.eq.s32.totalorder %s15, 0
    %p65 = por %p63, %p64
    %s66 = ssub.s32 %s16, %s35
    %s67 = ssub.s32 %s17, %s31
    %s68 = sor.u32 %s66, %s67
    %p69 = scmp.eq.s32.totalorder %s68, 0
    %s71 = sadd.s32 %s70, 1
    %s72 = scalar_select %p69, %s70, %s71
    %p75 = pneg %p69
    %p76 = scmp.eq.s32.totalorder %s9, 3
    %p77 = por %p75, %p76
    %p78 = scmp.ne.s32.totalorder %s70, %s73
    %p79 = scmp.eq.s32.totalorder %s9, 0
    %p80 = por %p78, %p79
    %p81 = scmp.ne.s32.totalorder %s70, %s73
    %p82 = scmp.eq.s32.totalorder %s14, 3
    %p83 = por %p81, %p82
    %p84 = scmp.ne.s32.totalorder %s73, %s74
    %p85 = scmp.eq.s32.totalorder %s14, 0
    %p86 = por %p84, %p85
    %p87 = scmp.ne.s32.totalorder %s73, %s74
    %p88 = scmp.eq.s32.totalorder %s15, 3
    %p89 = por %p87, %p88
    %p91 = scmp.ne.s32.totalorder %s74, %s90
    %p92 = scmp.eq.s32.totalorder %s15, 0
    %p93 = por %p91, %p92
    %s94 = ssub.s32 %s16, %s35
    %s95 = ssub.s32 %s17, %s31
    %s96 = sor.u32 %s94, %s95
    %p97 = scmp.eq.s32.totalorder %s96, 0
    %s99 = sadd.s32 %s98, 1
    %s100 = scalar_select %p97, %s98, %s99
    %p103 = pneg %p97
    %p104 = scmp.eq.s32.totalorder %s9, 3
    %p105 = por %p103, %p104
    %p106 = scmp.ne.s32.totalorder %s98, %s101
    %p107 = scmp.eq.s32.totalorder %s9, 0
    %p108 = por %p106, %p107
    %p109 = scmp.ne.s32.totalorder %s98, %s101
    %p110 = scmp.eq.s32.totalorder %s14, 3
    %p111 = por %p109, %p110
    %p112 = scmp.ne.s32.totalorder %s101, %s102
    %p113 = scmp.eq.s32.totalorder %s14, 0
    %p114 = por %p112, %p113
    %p115 = scmp.ne.s32.totalorder %s101, %s102
    %p116 = scmp.eq.s32.totalorder %s15, 3
    %p117 = por %p115, %p116
    %p119 = scmp.ne.s32.totalorder %s102, %s118
    %p120 = scmp.eq.s32.totalorder %s15, 0
    %p121 = por %p119, %p120
    %s122 = ssub.s32 %s16, %s35
    %s123 = ssub.s32 %s17, %s31
    %s124 = sor.u32 %s122, %s123
    %s125 = ssub.s32 %s18, %s27
    %s126 = sor.u32 %s124, %s125
    %p127 = scmp.eq.s32.totalorder %s126, 0
    %s129 = sadd.s32 %s128, 1
    %s130 = scalar_select %p127, %s128, %s129
    %p133 = pneg %p127
    %p134 = scmp.eq.s32.totalorder %s9, 3
    %p135 = por %p133, %p134
    %p136 = scmp.ne.s32.totalorder %s128, %s131
    %p137 = scmp.eq.s32.totalorder %s9, 0
    %p138 = por %p136, %p137
    %p139 = scmp.ne.s32.totalorder %s128, %s131
    %p140 = scmp.eq.s32.totalorder %s14, 3
    %p141 = por %p139, %p140
    %p142 = scmp.ne.s32.totalorder %s131, %s132
    %p143 = scmp.eq.s32.totalorder %s14, 0
    %p144 = por %p142, %p143
    %p145 = scmp.ne.s32.totalorder %s131, %s132
    %p146 = scmp.eq.s32.totalorder %s15, 3
    %p147 = por %p145, %p146
    %p149 = scmp.ne.s32.totalorder %s132, %s148
    %p150 = scmp.eq.s32.totalorder %s15, 0
    %p151 = por %p149, %p150
    %p152 = scmp.le.s32.totalorder 1, %s9
    %p153 = scmp.lt.s32.totalorder %s9, 5
    %p154 = pnand %p152, %p153
    %p155 = pneg %p154
    // Predicated region
    $region9: #{tpu_custom_call.1} parent=5 // pred_check
      _
    $region10: #{tpu_custom_call.1} parent=5 // pred_check_branch
      %157 = sbr.rel (%p154) target = $region12
    $region11: #{tpu_custom_call.1} parent=5 // pred_region
      %s158 = ssub.s32 %s9, 1
    $region12: #{tpu_custom_call.1} parent=5 // pred_fallthru
      _
    %p159 = scmp.lt.s32.totalorder %s9, 4
    // Predicated region
    $region13: #{tpu_custom_call.1} parent=5 // pred_check
      %p160 = pneg %p159
    $region14: #{tpu_custom_call.1} parent=5 // pred_check_branch
      %162 = sbr.rel (%p160) target = $region16
    $region15: #{tpu_custom_call.1} parent=5 // pred_region
      // Predicated region
      $region17: #{tpu_custom_call.1} parent=15 // pred_check
        %p163 = pneg %p52
      $region18: #{tpu_custom_call.1} parent=15 // pred_check_branch
        %165 = sbr.rel (%p163) target = $region20
      $region19: #{tpu_custom_call.1} parent=15 // pred_region
        %s166 = smul.u32 8, %s18
        %p167 = scmp.lt.s32.totalorder %s16, 1
        %s168 = scalar_select %p167, %s16, 1
        %p169 = scmp.lt.s32.totalorder %s17, 1
        %s170 = scalar_select %p169, %s17, 1
        %p171 = scmp.lt.s32.totalorder %s166, 7
        %s172 = scalar_select %p171, %s166, 7
        %s173 = smul.addr %s170, 8
        %s174 = sadd.s32 %s172, %s173
        %s175 = smul.addr %s168, 16
        %s176 = sadd.s32 %s174, %s175
        %s177 = smul.addr %s176, 4
        %s178 = scalar_lea.vmem %s0, %s177
        %s179 = smul.u32 8, %s18
      $region20: #{tpu_custom_call.1} parent=15 // pred_fallthru
        _
      // Predicated region
      $region21: #{tpu_custom_call.1} parent=15 // pred_check
        %p180 = pneg %p80
      $region22: #{tpu_custom_call.1} parent=15 // pred_check_branch
        %182 = sbr.rel (%p180) target = $region24
      $region23: #{tpu_custom_call.1} parent=15 // pred_region
        %p183 = scmp.lt.s32.totalorder %s16, 1
        %s184 = scalar_select %p183, %s16, 1
        %p185 = scmp.lt.s32.totalorder %s17, 1
        %s186 = scalar_select %p185, %s17, 1
        %s187 = smul.addr %s186, 8
        %s188 = smul.addr %s184, 16
        %s189 = sadd.s32 %s187, %s188
        %s190 = smul.addr %s189, 4
        %s191 = scalar_lea.vmem %s1, %s190
      $region24: #{tpu_custom_call.1} parent=15 // pred_fallthru
        _
      // Predicated region
      $region25: #{tpu_custom_call.1} parent=15 // pred_check
        %p192 = pneg %p108
      $region26: #{tpu_custom_call.1} parent=15 // pred_check_branch
        %194 = sbr.rel (%p192) target = $region28
      $region27: #{tpu_custom_call.1} parent=15 // pred_region
        %p195 = scmp.lt.s32.totalorder %s16, 1
        %s196 = scalar_select %p195, %s16, 1
        %p197 = scmp.lt.s32.totalorder %s17, 1
        %s198 = scalar_select %p197, %s17, 1
        %s199 = smul.addr %s198, 8
        %s200 = smul.addr %s196, 16
        %s201 = sadd.s32 %s199, %s200
        %s202 = smul.addr %s201, 4
        %s203 = scalar_lea.vmem %s2, %s202
      $region28: #{tpu_custom_call.1} parent=15 // pred_fallthru
        _
    $region16: #{tpu_custom_call.1} parent=5 // pred_fallthru
      _
    %p204 = scmp.le.s32.totalorder 1, %s9
    %p205 = scmp.lt.s32.totalorder %s9, 5
    %p206 = pnand %p204, %p205
    %p207 = pneg %p206
    // Predicated region
    $region29: #{tpu_custom_call.1} parent=5 // pred_check
      _
    $region30: #{tpu_custom_call.1} parent=5 // pred_check_branch
      %209 = sbr.rel (%p206) target = $region32
    $region31: #{tpu_custom_call.1} parent=5 // pred_region
      %s210 = ssub.s32 %s9, 1
      %s211 = smul.u32 8, %s21
      %p212 = scmp.lt.s32.totalorder %s19, 1
      %s213 = scalar_select %p212, %s19, 1
      %p214 = scmp.lt.s32.totalorder %s20, 1
      %s215 = scalar_select %p214, %s20, 1
      %p216 = scmp.lt.s32.totalorder %s211, 7
      %s217 = scalar_select %p216, %s211, 7
      %s218 = smul.addr %s215, 8
      %s219 = sadd.s32 %s217, %s218
      %s220 = smul.addr %s213, 16
      %s221 = sadd.s32 %s219, %s220
      %s222 = smul.addr %s221, 4
      %s223 = scalar_lea.vmem %s0, %s222
      %p224 = pneg %p58
      %p225 = pneg %p55
      %p226 = scmp.lt.s32.totalorder %s19, 1
      %s227 = scalar_select %p226, %s19, 1
      %p228 = scmp.lt.s32.totalorder %s20, 1
      %s229 = scalar_select %p228, %s20, 1
      %s230 = smul.addr %s229, 8
      %s231 = smul.addr %s227, 16
      %s232 = sadd.s32 %s230, %s231
      %s233 = smul.addr %s232, 4
      %s234 = scalar_lea.vmem %s1, %s233
      %p235 = pneg %p86
      %p236 = pneg %p83
      %p237 = scmp.lt.s32.totalorder %s19, 1
      %s238 = scalar_select %p237, %s19, 1
      %p239 = scmp.lt.s32.totalorder %s20, 1
      %s240 = scalar_select %p239, %s20, 1
      %s241 = smul.addr %s240, 8
      %s242 = smul.addr %s238, 16
      %s243 = sadd.s32 %s241, %s242
      %s244 = smul.addr %s243, 4
      %s245 = scalar_lea.vmem %s2, %s244
      %p246 = pneg %p114
      %p247 = pneg %p111
      %p248 = pneg %p144
      %p249 = pneg %p141
      %s250 = smul.u32 8, %s21
      %p251 = scmp.lt.s32.totalorder %s19, 1
      %s252 = scalar_select %p251, %s19, 1
      %p253 = scmp.lt.s32.totalorder %s20, 1
      %s254 = scalar_select %p253, %s20, 1
      %p255 = scmp.lt.s32.totalorder %s250, 7
      %s256 = scalar_select %p255, %s250, 7
      %s257 = smul.addr %s254, 8
      %s258 = sadd.s32 %s256, %s257
      %s259 = smul.addr %s252, 16
      %s260 = sadd.s32 %s258, %s259
      %s261 = smul.addr %s260, 4
      %s262 = scalar_lea.vmem %s3, %s261
      %s263 = smul.u32 8, %s21
      %p264 = scmp.lt.s32.totalorder %s19, 1
      %s265 = scalar_select %p264, %s19, 1
      %p266 = scmp.lt.s32.totalorder %s20, 1
      %s267 = scalar_select %p266, %s20, 1
      %p268 = scmp.lt.s32.totalorder %s263, 7
      %s269 = scalar_select %p268, %s263, 7
      %s270 = smul.addr %s267, 8
      %s271 = sadd.s32 %s269, %s270
      %s272 = smul.addr %s265, 16
      %s273 = sadd.s32 %s271, %s272
      %s274 = smul.addr %s273, 4
      %s275 = scalar_lea.vmem %s0, %s274
      %s276 = smul.u32 8, %s21
      %p277 = scmp.lt.s32.totalorder %s19, 1
      %s278 = scalar_select %p277, %s19, 1
      %p279 = scmp.lt.s32.totalorder %s20, 1
      %s280 = scalar_select %p279, %s20, 1
      %s281 = smul.addr %s280, 8
      %s282 = smul.addr %s278, 16
      %s283 = sadd.s32 %s281, %s282
      %s284 = smul.addr %s283, 4
      %s285 = scalar_lea.vmem %s1, %s284
      %p286 = scmp.lt.s32.totalorder %s19, 1
      %s287 = scalar_select %p286, %s19, 1
      %p288 = scmp.lt.s32.totalorder %s20, 1
      %s289 = scalar_select %p288, %s20, 1
      %s290 = smul.addr %s289, 8
      %s291 = smul.addr %s287, 16
      %s292 = sadd.s32 %s290, %s291
      %s293 = smul.addr %s292, 4
      %s294 = scalar_lea.vmem %s2, %s293
      %s295 = smul.u32 8, %s21
      %p296 = scmp.lt.s32.totalorder %s19, 1
      %s297 = scalar_select %p296, %s19, 1
      %p298 = scmp.lt.s32.totalorder %s20, 1
      %s299 = scalar_select %p298, %s20, 1
      %p300 = scmp.lt.s32.totalorder %s295, 7
      %s301 = scalar_select %p300, %s295, 7
      %s302 = smul.addr %s299, 8
      %s303 = sadd.s32 %s301, %s302
      %s304 = smul.addr %s297, 16
      %s305 = sadd.s32 %s303, %s304
      %s306 = smul.addr %s305, 4
      %s307 = scalar_lea.vmem %s3, %s306
      %s308 = smul.u32 8, %s21
      %v310 = vld [vmem:[%s275] sm:$0xf]
      %v311 = vld [vmem:[%s275 + $0x4] sm:$0xf]
      %v312 = vld [vmem:[%s275 + $0x8] sm:$0xf]
      %v313 = vld [vmem:[%s275 + $0xc] sm:$0xf]
      %v314 = vld [vmem:[%s275 + $0x10] sm:$0xf]
      %v315 = vld [vmem:[%s275 + $0x14] sm:$0xf]
      %v316 = vld [vmem:[%s275 + $0x18] sm:$0xf]
      %v317 = vld [vmem:[%s275 + $0x1c] sm:$0xf]
      %v318 = vld [vmem:[%s285] sm:$0xf]
      %v319 = vld [vmem:[%s285 + $0x4] sm:$0xf]
      %v320 = vld [vmem:[%s285 + $0x8] sm:$0xf]
      %v321 = vld [vmem:[%s285 + $0xc] sm:$0xf]
      %v322 = vld [vmem:[%s285 + $0x10] sm:$0xf]
      %v323 = vld [vmem:[%s285 + $0x14] sm:$0xf]
      %v324 = vld [vmem:[%s285 + $0x18] sm:$0xf]
      %v325 = vld [vmem:[%s285 + $0x1c] sm:$0xf]
      %v326 = vld [vmem:[%s294] sm:$0xf]
      %v327 = vld [vmem:[%s294 + $0x4] sm:$0xf]
      %v328 = vld [vmem:[%s294 + $0x8] sm:$0xf]
      %v329 = vld [vmem:[%s294 + $0xc] sm:$0xf]
      %v330 = vld [vmem:[%s294 + $0x10] sm:$0xf]
      %v331 = vld [vmem:[%s294 + $0x14] sm:$0xf]
      %v332 = vld [vmem:[%s294 + $0x18] sm:$0xf]
      %v333 = vld [vmem:[%s294 + $0x1c] sm:$0xf]
      %v342 = vunpack.c.l.b16 %v310
      %v343 = vunpack.c.l.b16 %v311
      %v344 = vunpack.c.l.b16 %v312
      %v345 = vunpack.c.l.b16 %v313
      %v346 = vunpack.c.l.b16 %v314
      %v347 = vunpack.c.l.b16 %v315
      %v348 = vunpack.c.l.b16 %v316
      %v349 = vunpack.c.l.b16 %v317
      %v350 = vpack.c.b16 %v343, %v342
      %v351 = vpack.c.b16 %v345, %v344
      %v352 = vpack.c.b16 %v347, %v346
      %v353 = vpack.c.b16 %v349, %v348
      %v362 = vunpack.c.l.b16 %v318
      %v363 = vunpack.c.l.b16 %v319
      %v364 = vunpack.c.l.b16 %v320
      %v365 = vunpack.c.l.b16 %v321
      %v366 = vunpack.c.l.b16 %v322
      %v367 = vunpack.c.l.b16 %v323
      %v368 = vunpack.c.l.b16 %v324
      %v369 = vunpack.c.l.b16 %v325
      %v370 = vpack.c.b16 %v363, %v362
      %v371 = vpack.c.b16 %v365, %v364
      %v372 = vpack.c.b16 %v367, %v366
      %v373 = vpack.c.b16 %v369, %v368
      %vm374 = vcmask 130048
      %v376 = vsel %vm374, %v350, 0
      %v379 = vsel %vm374, %v351, 0
      %v382 = vsel %vm374, %v352, 0
      %v385 = vsel %vm374, %v353, 0
      %v388 = vsel %vm374, %v370, 0
      %v391 = vsel %vm374, %v371, 0
      %v394 = vsel %vm374, %v372, 0
      %v397 = vsel %vm374, %v373, 0
      %399 = vmatprep.subr.bf16.mxu0 0
      %400 = vmatpush1.bf16.xpose.msra.mxu0 %v388
      %401 = vmatprep.subr.bf16.mxu0 0
      %402 = vmatpush1.bf16.xpose.msra.mxu0 %v391
      %403 = vmatprep.subr.bf16.mxu0 0
      %404 = vmatpush1.bf16.xpose.msra.mxu0 %v394
      %405 = vmatprep.subr.bf16.mxu0 0
      %406 = vmatpush1.bf16.xpose.msra.mxu0 %v397
      %407 = vmatprep.subr.bf16.mxu0 0
      %408 = vmatpush1.bf16.xpose.msra.mxu0 0
      %409 = vmatprep.subr.bf16.mxu0 0
      %410 = vmatpush1.bf16.xpose.msra.mxu0 0
      %411 = vmatprep.subr.bf16.mxu0 0
      %412 = vmatpush1.bf16.xpose.msra.mxu0 0
      %413 = vmatprep.subr.bf16.mxu0 0
      %414 = vmatpush1.bf16.xpose.msra.mxu0 0
      %415 = vmatprep.subr.bf16.mxu0 0
      %416 = vmatpush1.bf16.xpose.msra.mxu0 0
      %417 = vmatprep.subr.bf16.mxu0 0
      %418 = vmatpush1.bf16.xpose.msra.mxu0 0
      %419 = vmatprep.subr.bf16.mxu0 0
      %420 = vmatpush1.bf16.xpose.msra.mxu0 0
      %421 = vmatprep.subr.bf16.mxu0 0
      %422 = vmatpush1.bf16.xpose.msra.mxu0 0
      %423 = vmatprep.subr.bf16.mxu0 0
      %424 = vmatpush1.bf16.xpose.msra.mxu0 0
      %425 = vmatprep.subr.bf16.mxu0 0
      %426 = vmatpush1.bf16.xpose.msra.mxu0 0
      %427 = vmatprep.subr.bf16.mxu0 0
      %428 = vmatpush1.bf16.xpose.msra.mxu0 0
      %429 = vmatprep.subr.bf16.mxu0 0
      %430 = vmatpush1.bf16.xpose.msra.mxu0 0
      %431 = vmatprep.mubr.bf16.mxu0 0
      %432 = vmatmul.mubr.bf16.gmra.mrb[0].mxu0 %v376
      %v433 = vpop.f32.mrb[0].mxu0
      %v434 = vadd.f32 0.0, %v433
      %v435 = vpop.f32.mrb[0].mxu0
      %v436 = vpop.f32.mrb[0].mxu0
      %v437 = vadd.f32 0.0, %v436
      %v438 = vpop.f32.mrb[0].mxu0
      %439 = vmatprep.mubr.bf16.mxu0 0
      %440 = vmatmul.mubr.bf16.gmra.mrb[0].mxu0 %v379
      %v441 = vpop.f32.mrb[0].mxu0
      %v442 = vadd.f32 0.0, %v441
      %v443 = vpop.f32.mrb[0].mxu0
      %v444 = vpop.f32.mrb[0].mxu0
      %v445 = vadd.f32 0.0, %v444
      %v446 = vpop.f32.mrb[0].mxu0
      %447 = vmatprep.mubr.bf16.mxu0 0
      %448 = vmatmul.mubr.bf16.gmra.mrb[0].mxu0 %v382
      %v449 = vpop.f32.mrb[0].mxu0
      %v450 = vadd.f32 0.0, %v449
      %v451 = vpop.f32.mrb[0].mxu0
      %v452 = vpop.f32.mrb[0].mxu0
      %v453 = vadd.f32 0.0, %v452
      %v454 = vpop.f32.mrb[0].mxu0
      %455 = vmatprep.mubr.bf16.mxu0 0
      %456 = vmatmul.mubr.bf16.gmra.mrb[0].mxu0 %v385
      %v457 = vpop.f32.mrb[0].mxu0
      %v458 = vadd.f32 0.0, %v457
      %v459 = vpop.f32.mrb[0].mxu0
      %v460 = vpop.f32.mrb[0].mxu0
      %v461 = vadd.f32 0.0, %v460
      %v462 = vpop.f32.mrb[0].mxu0
      %463 = vdwg.mxu0
      %vm464 = vcmask 523264
      %v465 = vsel %vm464, %v434, -inf
      %466 = vmax.xlane.f32.xlu0 %v465
      %v467 = vpop.xlane.xlu0 %466
      %v468 = vsel %vm464, %v437, -inf
      %469 = vmax.xlane.f32.xlu0 %v468
      %v470 = vpop.xlane.xlu0 %469
      %v471 = vsel %vm464, %v442, -inf
      %472 = vmax.xlane.f32.xlu0 %v471
      %v473 = vpop.xlane.xlu0 %472
      %v474 = vsel %vm464, %v445, -inf
      %475 = vmax.xlane.f32.xlu0 %v474
      %v476 = vpop.xlane.xlu0 %475
      %v477 = vsel %vm464, %v450, -inf
      %478 = vmax.xlane.f32.xlu0 %v477
      %v479 = vpop.xlane.xlu0 %478
      %v480 = vsel %vm464, %v453, -inf
      %481 = vmax.xlane.f32.xlu0 %v480
      %v482 = vpop.xlane.xlu0 %481
      %v483 = vsel %vm464, %v458, -inf
      %484 = vmax.xlane.f32.xlu0 %v483
      %v485 = vpop.xlane.xlu0 %484
      %v486 = vsel %vm464, %v461, -inf
      %487 = vmax.xlane.f32.xlu0 %v486
      %v488 = vpop.xlane.xlu0 %487
      %v489 = vsub.f32 %v434, %v467
      %v490 = vsub.f32 %v437, %v470
      %v491 = vsub.f32 %v442, %v473
      %v492 = vsub.f32 %v445, %v476
      %v493 = vsub.f32 %v450, %v479
      %v494 = vsub.f32 %v453, %v482
      %v495 = vsub.f32 %v458, %v485
      %v496 = vsub.f32 %v461, %v488
      %v497 = vpack.c.bf16 %v490, %v489
      %v498 = vpack.c.bf16 %v492, %v491
      %v499 = vpack.c.bf16 %v494, %v493
      %v500 = vpack.c.bf16 %v496, %v495
      %v502 = vmul.bf16 %v497, 1069105081
      %v503 = vpow.bf16.pop %v502
      %v505 = vmul.bf16 %v498, 1069105081
      %v506 = vpow.bf16.pop %v505
      %v508 = vmul.bf16 %v499, 1069105081
      %v509 = vpow.bf16.pop %v508
      %v511 = vmul.bf16 %v500, 1069105081
      %v512 = vpow.bf16.pop %v511
      %v513 = vunpack.c.l.bf16 %v503
      %v514 = vunpack.c.h.bf16 %v503
      %v515 = vunpack.c.l.bf16 %v506
      %v516 = vunpack.c.h.bf16 %v506
      %v517 = vunpack.c.l.bf16 %v509
      %v518 = vunpack.c.h.bf16 %v509
      %v519 = vunpack.c.l.bf16 %v512
      %v520 = vunpack.c.h.bf16 %v512
      %v521 = vsel %vm464, %v513, 0.0
      %522 = vadd.xlane.f32.xlu0 %v521
      %v523 = vpop.xlane.xlu0 %522
      %v524 = vsel %vm464, %v514, 0.0
      %525 = vadd.xlane.f32.xlu0 %v524
      %v526 = vpop.xlane.xlu0 %525
      %v527 = vsel %vm464, %v515, 0.0
      %528 = vadd.xlane.f32.xlu0 %v527
      %v529 = vpop.xlane.xlu0 %528
      %v530 = vsel %vm464, %v516, 0.0
      %531 = vadd.xlane.f32.xlu0 %v530
      %v532 = vpop.xlane.xlu0 %531
      %v533 = vsel %vm464, %v517, 0.0
      %534 = vadd.xlane.f32.xlu0 %v533
      %v535 = vpop.xlane.xlu0 %534
      %v536 = vsel %vm464, %v518, 0.0
      %537 = vadd.xlane.f32.xlu0 %v536
      %v538 = vpop.xlane.xlu0 %537
      %v539 = vsel %vm464, %v519, 0.0
      %540 = vadd.xlane.f32.xlu0 %v539
      %v541 = vpop.xlane.xlu0 %540
      %v542 = vsel %vm464, %v520, 0.0
      %543 = vadd.xlane.f32.xlu0 %v542
      %v544 = vpop.xlane.xlu0 %543
      %v553 = vunpack.c.l.b16 %v326
      %v554 = vunpack.c.l.b16 %v327
      %v555 = vunpack.c.l.b16 %v328
      %v556 = vunpack.c.l.b16 %v329
      %v557 = vunpack.c.l.b16 %v330
      %v558 = vunpack.c.l.b16 %v331
      %v559 = vunpack.c.l.b16 %v332
      %v560 = vunpack.c.l.b16 %v333
      %v561 = vpack.c.b16 %v554, %v553
      %v562 = vpack.c.b16 %v556, %v555
      %v563 = vpack.c.b16 %v558, %v557
      %v564 = vpack.c.b16 %v560, %v559
      %v570 = vsel %vm464, %v503, 0
      %v573 = vsel %vm464, %v506, 0
      %v576 = vsel %vm464, %v509, 0
      %v579 = vsel %vm464, %v512, 0
      %581 = vmatprep.subr.bf16.mxu0 0
      %582 = vmatpush1.bf16.msra.mxu0 %v561
      %583 = vmatprep.subr.bf16.mxu0 0
      %584 = vmatpush1.bf16.msra.mxu0 %v562
      %585 = vmatprep.subr.bf16.mxu0 0
      %586 = vmatpush1.bf16.msra.mxu0 %v563
      %587 = vmatprep.subr.bf16.mxu0 0
      %588 = vmatpush1.bf16.msra.mxu0 %v564
      %589 = vmatprep.subr.bf16.mxu0 0
      %590 = vmatpush1.bf16.msra.mxu0 0
      %591 = vmatprep.subr.bf16.mxu0 0
      %592 = vmatpush1.bf16.msra.mxu0 0
      %593 = vmatprep.subr.bf16.mxu0 0
      %594 = vmatpush1.bf16.msra.mxu0 0
      %595 = vmatprep.subr.bf16.mxu0 0
      %596 = vmatpush1.bf16.msra.mxu0 0
      %597 = vmatprep.subr.bf16.mxu0 0
      %598 = vmatpush1.bf16.msra.mxu0 0
      %599 = vmatprep.subr.bf16.mxu0 0
      %600 = vmatpush1.bf16.msra.mxu0 0
      %601 = vmatprep.subr.bf16.mxu0 0
      %602 = vmatpush1.bf16.msra.mxu0 0
      %603 = vmatprep.subr.bf16.mxu0 0
      %604 = vmatpush1.bf16.msra.mxu0 0
      %605 = vmatprep.subr.bf16.mxu0 0
      %606 = vmatpush1.bf16.msra.mxu0 0
      %607 = vmatprep.subr.bf16.mxu0 0
      %608 = vmatpush1.bf16.msra.mxu0 0
      %609 = vmatprep.subr.bf16.mxu0 0
      %610 = vmatpush1.bf16.msra.mxu0 0
      %611 = vmatprep.subr.bf16.mxu0 0
      %612 = vmatpush1.bf16.msra.mxu0 0
      %613 = vmatprep.mubr.bf16.mxu0 0
      %614 = vmatmul.mubr.bf16.gmra.mrb[0].mxu0 %v570
      %v615 = vpop.f32.mrb[0].mxu0
      %v616 = vadd.f32 0.0, %v615
      %v617 = vpop.f32.mrb[0].mxu0
      %v618 = vpop.f32.mrb[0].mxu0
      %v619 = vadd.f32 0.0, %v618
      %v620 = vpop.f32.mrb[0].mxu0
      %621 = vmatprep.mubr.bf16.mxu0 0
      %622 = vmatmul.mubr.bf16.gmra.mrb[0].mxu0 %v573
      %v623 = vpop.f32.mrb[0].mxu0
      %v624 = vadd.f32 0.0, %v623
      %v625 = vpop.f32.mrb[0].mxu0
      %v626 = vpop.f32.mrb[0].mxu0
      %v627 = vadd.f32 0.0, %v626
      %v628 = vpop.f32.mrb[0].mxu0
      %629 = vmatprep.mubr.bf16.mxu0 0
      %630 = vmatmul.mubr.bf16.gmra.mrb[0].mxu0 %v576
      %v631 = vpop.f32.mrb[0].mxu0
      %v632 = vadd.f32 0.0, %v631
      %v633 = vpop.f32.mrb[0].mxu0
      %v634 = vpop.f32.mrb[0].mxu0
      %v635 = vadd.f32 0.0, %v634
      %v636 = vpop.f32.mrb[0].mxu0
      %637 = vmatprep.mubr.bf16.mxu0 0
      %638 = vmatmul.mubr.bf16.gmra.mrb[0].mxu0 %v579
      %v639 = vpop.f32.mrb[0].mxu0
      %v640 = vadd.f32 0.0, %v639
      %v641 = vpop.f32.mrb[0].mxu0
      %v642 = vpop.f32.mrb[0].mxu0
      %v643 = vadd.f32 0.0, %v642
      %v644 = vpop.f32.mrb[0].mxu0
      %645 = vdwg.mxu0
      %v646 = vrcp.pop %v523
      %v647 = vrcp.pop %v526
      %v648 = vrcp.pop %v529
      %v649 = vrcp.pop %v532
      %v650 = vrcp.pop %v535
      %v651 = vrcp.pop %v538
      %v652 = vrcp.pop %v541
      %v653 = vrcp.pop %v544
      %v654 = vmul.f32 %v616, %v646
      %v655 = vmul.f32 %v619, %v647
      %v656 = vmul.f32 %v624, %v648
      %v657 = vmul.f32 %v627, %v649
      %v658 = vmul.f32 %v632, %v650
      %v659 = vmul.f32 %v635, %v651
      %v660 = vmul.f32 %v640, %v652
      %v661 = vmul.f32 %v643, %v653
      %v662 = vpack.c.bf16 %v655, %v654
      %v663 = vpack.c.bf16 %v657, %v656
      %v664 = vpack.c.bf16 %v659, %v658
      %v665 = vpack.c.bf16 %v661, %v660
      %v670 = vunpack.c.l.b16 %v662
      %v671 = vunpack.c.h.b16 %v662
      %v672 = vunpack.c.l.b16 %v663
      %v673 = vunpack.c.h.b16 %v663
      %v674 = vunpack.c.l.b16 %v664
      %v675 = vunpack.c.h.b16 %v664
      %v676 = vunpack.c.l.b16 %v665
      %v677 = vunpack.c.h.b16 %v665
      %v678 = vpack.c.b16 %v670, %v670
      %v679 = vpack.c.b16 %v671, %v671
      %v680 = vpack.c.b16 %v672, %v672
      %v681 = vpack.c.b16 %v673, %v673
      %v682 = vpack.c.b16 %v674, %v674
      %v683 = vpack.c.b16 %v675, %v675
      %v684 = vpack.c.b16 %v676, %v676
      %v685 = vpack.c.b16 %v677, %v677
      %vm694 = vcmask 125952
      %695 = vst.msk [vmem:[%s307] sm:$0xf] %vm694, %v678
      %696 = vst.msk [vmem:[%s307 + $0x4] sm:$0xf] %vm694, %v679
      %697 = vst.msk [vmem:[%s307 + $0x8] sm:$0xf] %vm694, %v680
      %698 = vst.msk [vmem:[%s307 + $0xc] sm:$0xf] %vm694, %v681
      %699 = vst.msk [vmem:[%s307 + $0x10] sm:$0xf] %vm694, %v682
      %700 = vst.msk [vmem:[%s307 + $0x14] sm:$0xf] %vm694, %v683
      %701 = vst.msk [vmem:[%s307 + $0x18] sm:$0xf] %vm694, %v684
      %702 = vst.msk [vmem:[%s307 + $0x1c] sm:$0xf] %vm694, %v685
      %s703 = smul.u32 8, %s21
      %p704 = scmp.lt.s32.totalorder %s19, 1
      %s705 = scalar_select %p704, %s19, 1
      %p706 = scmp.lt.s32.totalorder %s20, 1
      %s707 = scalar_select %p706, %s20, 1
      %p708 = scmp.lt.s32.totalorder %s703, 7
      %s709 = scalar_select %p708, %s703, 7
      %s710 = smul.addr %s707, 8
      %s711 = sadd.s32 %s709, %s710
      %s712 = smul.addr %s705, 16
      %s713 = sadd.s32 %s711, %s712
      %s714 = smul.addr %s713, 4
      %s715 = scalar_lea.vmem %s3, %s714
      // Predicated region
      $region33: #{tpu_custom_call.1} parent=31 // pred_check
        %p716 = pneg %p141
      $region34: #{tpu_custom_call.1} parent=31 // pred_check_branch
        %718 = sbr.rel (%p716) target = $region36
      $region35: #{tpu_custom_call.1} parent=31 // pred_region
        %s719 = smul.u32 8, %s21
      $region36: #{tpu_custom_call.1} parent=31 // pred_fallthru
        _
    $region32: #{tpu_custom_call.1} parent=5 // pred_fallthru
      _
    %p720 = scmp.le.s32.totalorder 2, %s9
    // Predicated region
    $region37: #{tpu_custom_call.1} parent=5 // pred_check
      %p721 = pneg %p720
    $region38: #{tpu_custom_call.1} parent=5 // pred_check_branch
      %723 = sbr.rel (%p721) target = $region40
    $region39: #{tpu_custom_call.1} parent=5 // pred_region
      %s724 = ssub.s32 %s9, 2
      // Predicated region
      $region41: #{tpu_custom_call.1} parent=39 // pred_check
        %p725 = pneg %p147
      $region42: #{tpu_custom_call.1} parent=39 // pred_check_branch
        %727 = sbr.rel (%p725) target = $region44
      $region43: #{tpu_custom_call.1} parent=39 // pred_region
        %s728 = smul.u32 8, %s24
        %p729 = scmp.lt.s32.totalorder %s22, 1
        %s730 = scalar_select %p729, %s22, 1
        %p731 = scmp.lt.s32.totalorder %s23, 1
        %s732 = scalar_select %p731, %s23, 1
        %p733 = scmp.lt.s32.totalorder %s728, 7
        %s734 = scalar_select %p733, %s728, 7
        %s735 = smul.addr %s732, 8
        %s736 = sadd.s32 %s734, %s735
        %s737 = smul.addr %s730, 16
        %s738 = sadd.s32 %s736, %s737
        %s739 = smul.addr %s738, 4
        %s740 = scalar_lea.vmem %s3, %s739
      $region44: #{tpu_custom_call.1} parent=39 // pred_fallthru
        _
    $region40: #{tpu_custom_call.1} parent=5 // pred_fallthru
      _
  $region6: #{tpu_custom_call.1} parent=0 // loop_footer
    %s13 = sadd.s32 1, %s9
  $region7: #{tpu_custom_call.1} parent=0 // loop_footer_branch
    %8 = sbr.rel target = $region3
  $region8: #{tpu_custom_call.1} parent=0 // loop_exit
    _

</llo_original>
